<compile_context>
chip_gen: v7x
topology: tpu7x:2x2x1
jax: 0.10.0
libtpu: 0.0.40
codegen_flags: <defaults>
</compile_context>

<pallas_src>
import functools

import numpy as np
import jax
import jax.numpy as jnp
from jax.experimental import pallas as pl
from jax.experimental.pallas import tpu as pltpu

_EPS = 1e-7
_TILE_P_MAX = 256   # sublane axis (predictions) tile cap
_TILE_G_MAX = 512   # lane axis (GT boxes) tile cap (v5e scoped-VMEM headroom)


def _round_up(x, m):
    return ((x + m - 1) // m) * m


def _ceil_div(a, b):
    return -(-a // b)


def _pad_sizes(p, g, batch):
    """Choose padded sizes / tiles from the actual maxima (minimal dead padding)."""
    p_pad = _round_up(max(int(p), 8), 8)
    n_pt = _ceil_div(p_pad, _TILE_P_MAX)
    tile_p = _round_up(_ceil_div(p_pad, n_pt), 8)
    p_pad = tile_p * n_pt

    g_pad = _round_up(max(int(g), 128), 128)
    n_gt = _ceil_div(g_pad, _TILE_G_MAX)
    # Make sure the fully-"parallel" grid has >= 2 points so both TensorCores
    # on v7x get work even when B == 1 (free: output stays lane-dense >= 128).
    if batch * n_pt * n_gt < 2 and g_pad >= 256:
        n_gt = 2
    tile_g = _round_up(_ceil_div(g_pad, n_gt), 128)
    g_pad = tile_g * n_gt
    return p_pad, tile_p, n_pt, g_pad, tile_g, n_gt


# ----------------------------------------------------------------------------
# Pallas kernel: negated pairwise generalized IoU (Hungarian cost matrix)
# ----------------------------------------------------------------------------
def _make_neg_giou_kernel(tile_p, n_pt):
    def kernel(pred_ref, gt_ref, out_ref):
        # pred_ref: [1, Ppad, 4] whole per-batch prediction block (resident)
        # gt_ref:   [1, 4, TG]   GT boxes transposed -> GT on lanes
        # out_ref:  [1, TP, TG]  cost = -GIoU
        if n_pt == 1:
            pred = pred_ref[0]                                    # [TP, 4]
        else:
            start = pl.multiple_of(pl.program_id(1) * tile_p, 8)
            pred = pred_ref[0, pl.ds(start, tile_p), :]           # [TP, 4]
        gt = gt_ref[0]                                            # [4, TG]

        px1 = pred[:, 0:1]
        py1 = pred[:, 1:2]
        px2 = pred[:, 2:3]
        py2 = pred[:, 3:4]
        gx1 = gt[0:1, :]
        gy1 = gt[1:2, :]
        gx2 = gt[2:3, :]
        gy2 = gt[3:4, :]

        area_p = (px2 - px1) * (py2 - py1)                        # [TP, 1]
        area_g = (gx2 - gx1) * (gy2 - gy1)                        # [1, TG]

        # Implicit [TP,1] x [1,TG] broadcasting in straight-line code; no
        # explicit full-tile broadcast_to materializations.
        iw = jnp.maximum(jnp.minimum(px2, gx2) - jnp.maximum(px1, gx1), 0.0)
        ih = jnp.maximum(jnp.minimum(py2, gy2) - jnp.maximum(py1, gy1), 0.0)
        inter = iw * ih                                           # [TP, TG]
        union = jnp.maximum(area_p + area_g - inter, _EPS)

        # Smallest enclosing box.
        ew = jnp.maximum(px2, gx2) - jnp.minimum(px1, gx1)
        eh = jnp.maximum(py2, gy2) - jnp.minimum(py1, gy1)
        area_e = jnp.maximum(ew * eh, _EPS)

        # EUP approximate reciprocal + one Newton step (assignment parity with
        # exact divide at ~2 extra VALU ops/element; EUP slot is otherwise idle).
        r_u = pl.reciprocal(union, approx=True)
        r_u = r_u * (2.0 - union * r_u)
        r_e = pl.reciprocal(area_e, approx=True)
        r_e = r_e * (2.0 - area_e * r_e)

        # giou = inter/union + union/area_e - 1 ;  cost = -giou
        out_ref[0] = 1.0 - inter * r_u - union * r_e

    return kernel


@functools.partial(jax.jit,
                   static_argnames=("tile_p", "tile_g", "p_out", "g_out"))
def _neg_giou_call(pred_all, gt_all_t, tile_p, tile_g, p_out, g_out):
    """pred_all: [B, Ppad, 4], gt_all_t: [B, 4, Gpad] -> cost [B, p_out, g_out]."""
    B, p_pad, _ = pred_all.shape
    g_pad = gt_all_t.shape[2]
    n_pt = p_pad // tile_p
    n_gt = g_pad // tile_g
    cost = pl.pallas_call(
        _make_neg_giou_kernel(tile_p, n_pt),
        out_shape=jax.ShapeDtypeStruct((B, p_pad, g_pad), jnp.float32),
        grid=(B, n_pt, n_gt),
        in_specs=[
            # Whole per-batch prediction block: one DMA per batch, resident
            # across (i, j) tiles instead of many tiny strided re-fetches.
            pl.BlockSpec((1, p_pad, 4), lambda b, i, j: (b, 0, 0)),
            pl.BlockSpec((1, 4, tile_g), lambda b, i, j: (b, 0, j)),
        ],
        out_specs=pl.BlockSpec((1, tile_p, tile_g), lambda b, i, j: (b, i, j)),
        compiler_params=pltpu.CompilerParams(
            dimension_semantics=("parallel", "parallel", "parallel")),
    )(pred_all, gt_all_t)
    # Trim dead padding on device before the device->host transfer.
    return cost[:, :p_out, :g_out]


# ----------------------------------------------------------------------------
# Host-side Hungarian algorithm (linear_sum_assignment replacement)
# ----------------------------------------------------------------------------
def linear_sum_assignment_np(cost):
    # TODO(synk): the Hungarian augmenting-path search is sequential and
    # combinatorial; it has no clean Pallas equivalent and runs on the host.
    # Inner column scans are vectorized with numpy (O(n^3) total).
    cost = np.asarray(cost, dtype=np.float64)
    n_rows, n_cols = cost.shape
    if n_rows == 0 or n_cols == 0:
        return np.empty(0, np.int64), np.empty(0, np.int64)
    n = max(n_rows, n_cols)
    pad_val = (np.abs(cost).max() + 1.0) * 10.0
    sq = np.full((n, n), pad_val, dtype=np.float64)
    sq[:n_rows, :n_cols] = cost

    INF = np.inf
    u = np.zeros(n + 1)
    v = np.zeros(n + 1)
    p = np.zeros(n + 1, dtype=np.int64)
    way = np.zeros(n + 1, dtype=np.int64)
    for i in range(1, n + 1):
        p[0] = i
        j0 = 0
        minv = np.full(n + 1, INF)
        used = np.zeros(n + 1, dtype=bool)
        while True:
            used[j0] = True
            i0 = p[j0]
            free = ~used[1:]
            cur = sq[i0 - 1, :] - u[i0] - v[1:]
            upd = free & (cur < minv[1:])
            minv[1:][upd] = cur[upd]
            way[1:][upd] = j0
            masked = np.where(free, minv[1:], INF)
            j1 = int(np.argmin(masked)) + 1
            delta = masked[j1 - 1]
            used_js = np.nonzero(used)[0]
            u[p[used_js]] += delta
            v[used_js] -= delta
            minv[1:][free] -= delta
            j0 = j1
            if p[j0] == 0:
                break
        while True:
            j1 = way[j0]
            p[j0] = p[j1]
            j0 = j1
            if j0 == 0:
                break

    rows, cols = [], []
    for j in range(1, n + 1):
        r = int(p[j]) - 1
        c = j - 1
        if r < n_rows and c < n_cols:
            rows.append(r)
            cols.append(c)
    rows = np.asarray(rows, dtype=np.int64)
    cols = np.asarray(cols, dtype=np.int64)
    order = np.argsort(rows, kind="stable")
    return rows[order], cols[order]


# ----------------------------------------------------------------------------
# testHungarianMatcher.forward equivalent
# ----------------------------------------------------------------------------
def hungarian_matcher(outputs, targets, num_targets_per_batch):
    B = len(outputs)
    targets_np = np.asarray(targets)
    splits = np.cumsum(num_targets_per_batch)[:-1]
    batch_targets = np.split(targets_np, splits, axis=0)

    # Static padded sizes derived from the actual maxima.
    p_max = max(int(np.asarray(o["ori_boxes"]).shape[0]) for o in outputs)
    g_max = max(int(n) for n in num_targets_per_batch)
    p_pad, tile_p, _n_pt, g_pad, tile_g, _n_gt = _pad_sizes(p_max, g_max, B)

    # Build padded host arrays; dummy box [0,0,1,1] keeps padding finite.
    pred_all = np.tile(np.array([0.0, 0.0, 1.0, 1.0], np.float32), (B, p_pad, 1))
    gt_all = np.tile(np.array([0.0, 0.0, 1.0, 1.0], np.float32), (B, g_pad, 1))
    for b in range(B):
        pb = np.asarray(outputs[b]["ori_boxes"], dtype=np.float32)
        pred_all[b, : pb.shape[0]] = pb
        gb = batch_targets[b][:, 1:].astype(np.float32)
        if gb.shape[0]:
            gt_all[b, : gb.shape[0]] = gb
    gt_all_t = np.ascontiguousarray(np.transpose(gt_all, (0, 2, 1)))  # [B,4,Gpad]

    # Single batched device launch; D2H transfer is trimmed to [B, p_max, g_max].
    cost_all = np.asarray(jax.block_until_ready(
        _neg_giou_call(jnp.asarray(pred_all), jnp.asarray(gt_all_t),
                       tile_p, tile_g, max(p_max, 1), max(g_max, 1))))

    indices = []
    for b in range(B):
        pred_labels = np.asarray(outputs[b]["labels"])
        n_pred = int(np.asarray(outputs[b]["ori_boxes"]).shape[0])
        n_gt = int(num_targets_per_batch[b])

        valid_mask = pred_labels == 1
        if valid_mask.sum() == 0:
            indices.append((np.empty(0, np.int64), np.empty(0, np.int64)))
            continue

        cost = cost_all[b, :n_pred, :n_gt][valid_mask]   # [n_valid, n_gt]
        pred_idx, gt_idx = linear_sum_assignment_np(cost)
        pred_idx = np.nonzero(valid_mask)[0][pred_idx].astype(np.int64)
        indices.append((pred_idx, gt_idx.astype(np.int64)))
    return indices


# ----------------------------------------------------------------------------
# main
# ----------------------------------------------------------------------------
if __name__ == "__main__":
    key = jax.random.PRNGKey(0)
    B = 2          # batches
    P = 8          # predictions per batch
    num_targets_per_batch = [3, 5]
    total_gt = sum(num_targets_per_batch)

    k_pred, k_lab, k_gt = jax.random.split(key, 3)

    def rand_boxes(k, n):
        ka, kb = jax.random.split(k)
        xy = jax.random.uniform(ka, (n, 2), minval=0.0, maxval=0.5)
        wh = jax.random.uniform(kb, (n, 2), minval=0.1, maxval=0.5)
        return jnp.concatenate([xy, xy + wh], axis=-1).astype(jnp.float32)

    outputs = []
    pkeys = jax.random.split(k_pred, B)
    lkeys = jax.random.split(k_lab, B)
    for b in range(B):
        boxes = rand_boxes(pkeys[b], P)                              # [P, 4]
        labels = jax.random.bernoulli(lkeys[b], 0.6, (P,)).astype(jnp.int32)
        outputs.append({"ori_boxes": boxes, "labels": labels})

    gt_boxes = rand_boxes(k_gt, total_gt)                            # [total, 4]
    gt_class = jnp.zeros((total_gt, 1), dtype=jnp.float32)
    targets = jnp.concatenate([gt_class, gt_boxes], axis=-1)         # [total, 5]

    indices = hungarian_matcher(outputs, targets, num_targets_per_batch)

    # Sanity: indices are valid and matchings are injective.
    for b, (pi, gi) in enumerate(indices):
        assert pi.shape == gi.shape
        if pi.size:
            assert pi.max() < P and gi.max() < num_targets_per_batch[b]
            assert len(set(pi.tolist())) == pi.size
            assert len(set(gi.tolist())) == gi.size

    print("KERNEL_OK")
</pallas_src>

<mosaic_0001>
module attributes {stable_mosaic.version = 11 : i64} {
  func.func @kernel(%arg0: i32, %arg1: i32, %arg2: i32, %arg3: memref<1x8x4xf32, #tpu.memory_space<vmem>>, %arg4: memref<1x4x128xf32, #tpu.memory_space<vmem>>, %arg5: memref<1x8x128xf32, #tpu.memory_space<vmem>>) attributes {dimension_semantics = [#tpu.dimension_semantics<parallel>, #tpu.dimension_semantics<parallel>, #tpu.dimension_semantics<parallel>], iteration_bounds = array<i64: 2, 1, 1>, scalar_prefetch = 0 : i64, scratch_operands = 0 : i64, tpu.core_type = #tpu.core_type<tc>, window_params = [{transform_indices = @transform_0, window_bounds = array<i64: 1, 8, 4>}, {transform_indices = @transform_1, window_bounds = array<i64: 1, 4, 128>}, {transform_indices = @transform_2, window_bounds = array<i64: 1, 8, 128>}]} {
    %c0 = arith.constant 0 : index
    %c0_0 = arith.constant 0 : index
    %c0_1 = arith.constant 0 : index
    %0 = vector.load %arg3[%c0, %c0_0, %c0_1] : memref<1x8x4xf32, #tpu.memory_space<vmem>>, vector<1x8x4xf32>
    %1 = vector.shape_cast %0 : vector<1x8x4xf32> to vector<8x4xf32>
    %c0_2 = arith.constant 0 : index
    %c0_3 = arith.constant 0 : index
    %c0_4 = arith.constant 0 : index
    %2 = vector.load %arg4[%c0_2, %c0_3, %c0_4] : memref<1x4x128xf32, #tpu.memory_space<vmem>>, vector<1x4x128xf32>
    %3 = vector.shape_cast %2 : vector<1x4x128xf32> to vector<4x128xf32>
    %4 = vector.extract_strided_slice %1 {offsets = [0, 0], sizes = [8, 1], strides = [1, 1]} : vector<8x4xf32> to vector<8x1xf32>
    %5 = vector.extract_strided_slice %1 {offsets = [0, 1], sizes = [8, 1], strides = [1, 1]} : vector<8x4xf32> to vector<8x1xf32>
    %6 = vector.extract_strided_slice %1 {offsets = [0, 2], sizes = [8, 1], strides = [1, 1]} : vector<8x4xf32> to vector<8x1xf32>
    %7 = vector.extract_strided_slice %1 {offsets = [0, 3], sizes = [8, 1], strides = [1, 1]} : vector<8x4xf32> to vector<8x1xf32>
    %8 = vector.extract_strided_slice %3 {offsets = [0, 0], sizes = [1, 128], strides = [1, 1]} : vector<4x128xf32> to vector<1x128xf32>
    %9 = vector.extract_strided_slice %3 {offsets = [1, 0], sizes = [1, 128], strides = [1, 1]} : vector<4x128xf32> to vector<1x128xf32>
    %10 = vector.extract_strided_slice %3 {offsets = [2, 0], sizes = [1, 128], strides = [1, 1]} : vector<4x128xf32> to vector<1x128xf32>
    %11 = vector.extract_strided_slice %3 {offsets = [3, 0], sizes = [1, 128], strides = [1, 1]} : vector<4x128xf32> to vector<1x128xf32>
    %12 = arith.subf %6, %4 : vector<8x1xf32>
    %13 = arith.subf %7, %5 : vector<8x1xf32>
    %14 = arith.mulf %12, %13 : vector<8x1xf32>
    %15 = arith.subf %10, %8 : vector<1x128xf32>
    %16 = arith.subf %11, %9 : vector<1x128xf32>
    %17 = arith.mulf %15, %16 : vector<1x128xf32>
    %18 = vector.broadcast %6 : vector<8x1xf32> to vector<8x128xf32>
    %19 = vector.broadcast %10 : vector<1x128xf32> to vector<8x128xf32>
    %20 = arith.minimumf %18, %19 : vector<8x128xf32>
    %21 = vector.broadcast %4 : vector<8x1xf32> to vector<8x128xf32>
    %22 = vector.broadcast %8 : vector<1x128xf32> to vector<8x128xf32>
    %23 = arith.maximumf %21, %22 : vector<8x128xf32>
    %24 = arith.subf %20, %23 : vector<8x128xf32>
    %cst = arith.constant 0.000000e+00 : f32
    %25 = vector.broadcast %cst : f32 to vector<8x128xf32>
    %26 = arith.maximumf %24, %25 : vector<8x128xf32>
    %27 = vector.broadcast %7 : vector<8x1xf32> to vector<8x128xf32>
    %28 = vector.broadcast %11 : vector<1x128xf32> to vector<8x128xf32>
    %29 = arith.minimumf %27, %28 : vector<8x128xf32>
    %30 = vector.broadcast %5 : vector<8x1xf32> to vector<8x128xf32>
    %31 = vector.broadcast %9 : vector<1x128xf32> to vector<8x128xf32>
    %32 = arith.maximumf %30, %31 : vector<8x128xf32>
    %33 = arith.subf %29, %32 : vector<8x128xf32>
    %cst_5 = arith.constant 0.000000e+00 : f32
    %34 = vector.broadcast %cst_5 : f32 to vector<8x128xf32>
    %35 = arith.maximumf %33, %34 : vector<8x128xf32>
    %36 = arith.mulf %26, %35 : vector<8x128xf32>
    %37 = vector.broadcast %14 : vector<8x1xf32> to vector<8x128xf32>
    %38 = vector.broadcast %17 : vector<1x128xf32> to vector<8x128xf32>
    %39 = arith.addf %37, %38 : vector<8x128xf32>
    %40 = arith.subf %39, %36 : vector<8x128xf32>
    %cst_6 = arith.constant 1.000000e-07 : f32
    %41 = vector.broadcast %cst_6 : f32 to vector<8x128xf32>
    %42 = arith.maximumf %40, %41 : vector<8x128xf32>
    %43 = vector.broadcast %6 : vector<8x1xf32> to vector<8x128xf32>
    %44 = vector.broadcast %10 : vector<1x128xf32> to vector<8x128xf32>
    %45 = arith.maximumf %43, %44 : vector<8x128xf32>
    %46 = vector.broadcast %4 : vector<8x1xf32> to vector<8x128xf32>
    %47 = vector.broadcast %8 : vector<1x128xf32> to vector<8x128xf32>
    %48 = arith.minimumf %46, %47 : vector<8x128xf32>
    %49 = arith.subf %45, %48 : vector<8x128xf32>
    %50 = vector.broadcast %7 : vector<8x1xf32> to vector<8x128xf32>
    %51 = vector.broadcast %11 : vector<1x128xf32> to vector<8x128xf32>
    %52 = arith.maximumf %50, %51 : vector<8x128xf32>
    %53 = vector.broadcast %5 : vector<8x1xf32> to vector<8x128xf32>
    %54 = vector.broadcast %9 : vector<1x128xf32> to vector<8x128xf32>
    %55 = arith.minimumf %53, %54 : vector<8x128xf32>
    %56 = arith.subf %52, %55 : vector<8x128xf32>
    %57 = arith.mulf %49, %56 : vector<8x128xf32>
    %cst_7 = arith.constant 1.000000e-07 : f32
    %58 = vector.broadcast %cst_7 : f32 to vector<8x128xf32>
    %59 = arith.maximumf %57, %58 : vector<8x128xf32>
    %60 = tpu.reciprocal %42 {approx = true} : vector<8x128xf32> -> vector<8x128xf32>
    %61 = arith.mulf %42, %60 : vector<8x128xf32>
    %cst_8 = arith.constant 2.000000e+00 : f32
    %62 = vector.broadcast %cst_8 : f32 to vector<8x128xf32>
    %63 = arith.subf %62, %61 : vector<8x128xf32>
    %64 = arith.mulf %60, %63 : vector<8x128xf32>
    %65 = tpu.reciprocal %59 {approx = true} : vector<8x128xf32> -> vector<8x128xf32>
    %66 = arith.mulf %59, %65 : vector<8x128xf32>
    %cst_9 = arith.constant 2.000000e+00 : f32
    %67 = vector.broadcast %cst_9 : f32 to vector<8x128xf32>
    %68 = arith.subf %67, %66 : vector<8x128xf32>
    %69 = arith.mulf %65, %68 : vector<8x128xf32>
    %70 = arith.mulf %36, %64 : vector<8x128xf32>
    %cst_10 = arith.constant 1.000000e+00 : f32
    %71 = vector.broadcast %cst_10 : f32 to vector<8x128xf32>
    %72 = arith.subf %71, %70 : vector<8x128xf32>
    %73 = arith.mulf %42, %69 : vector<8x128xf32>
    %74 = arith.subf %72, %73 : vector<8x128xf32>
    %c0_11 = arith.constant 0 : index
    %c0_12 = arith.constant 0 : index
    %c0_13 = arith.constant 0 : index
    %75 = vector.load %arg5[%c0_11, %c0_12, %c0_13] : memref<1x8x128xf32, #tpu.memory_space<vmem>>, vector<1x8x128xf32>
    %76 = vector.shape_cast %75 : vector<1x8x128xf32> to vector<8x128xf32>
    %77 = vector.shape_cast %74 : vector<8x128xf32> to vector<1x8x128xf32>
    tpu.vector_store %arg5[%c0_11, %c0_12, %c0_13], %77 {strides = array<i32>} : memref<1x8x128xf32, #tpu.memory_space<vmem>>, vector<1x8x128xf32>,
    return
  }
  func.func @transform_0(%arg0: i32, %arg1: i32, %arg2: i32) -> (i32, i32, i32) {
    %c0_i32 = arith.constant 0 : i32
    %c0_i32_0 = arith.constant 0 : i32
    %c0_i32_1 = arith.constant 0 : i32
    return %arg0, %c0_i32, %c0_i32_0 : i32, i32, i32
  }
  func.func @transform_1(%arg0: i32, %arg1: i32, %arg2: i32) -> (i32, i32, i32) {
    %c0_i32 = arith.constant 0 : i32
    %c0_i32_0 = arith.constant 0 : i32
    return %arg0, %c0_i32, %arg2 : i32, i32, i32
  }
  func.func @transform_2(%arg0: i32, %arg1: i32, %arg2: i32) -> (i32, i32, i32) {
    %c0_i32 = arith.constant 0 : i32
    return %arg0, %arg1, %arg2 : i32, i32, i32
  }
}

</mosaic_0001>

<llo_original>
// kernel: _neg_giou_call.1
$region0: #{_neg_giou_call.1}
  #allocation0 [shape = 'u32[]', space=smem, size = 0x4, offset = 0x4, fixed_abs, tag = 'smem constant byte address 0x4 - core index']
  #allocation1 [shape = 'u32[144,128]{1,0:T(1,128)}', space=vmem, size = 0x12000, scoped, tag = 'internal scratch']
  %s0 = inlined_call_operand.vmem [shape: f32[2,8,4], index: 0, kind: input, shape index: {}]
  %s1 = inlined_call_operand.vmem [shape: f32[2,4,128], index: 1, kind: input, shape index: {}]
  %s2 = inlined_call_operand.vmem [shape: f32[2,8,128], index: 2, kind: output, shape index: {}]
  %s3 = sld [smem:[#allocation0]]
  $region41: #{_neg_giou_call.1} parent=0
    _
  %s5 = ssub.s32 1, %s3
  %s6 = scalar_select 0, %s5, %s3
  loop: start=0, step=1, limit=4
  $region2: #{_neg_giou_call.1} parent=0 // loop_pre_header
    _
  $region3: #{_neg_giou_call.1} parent=0 // loop_header
    %s8 = sphi 0, %s12
    %p9 = scmp.ge.s32.totalorder %s8, 4
    %s15 = sphi 0, %s34
    %s16 = sphi 0, %s30
    %s17 = sphi 0, %s26
    %s18 = sphi 0, %s15
    %s19 = sphi 0, %s16
    %s20 = sphi 0, %s17
    %s21 = sphi 0, %s18
    %s22 = sphi 0, %s19
    %s23 = sphi 0, %s20
    %s37 = sphi 0, %s39
    %s40 = sphi 0, %s37
    %s41 = sphi 0, %s40
    %s57 = sphi 0, %s41
    %s65 = sphi 0, %s67
    %s68 = sphi 0, %s65
    %s69 = sphi 0, %s68
    %s85 = sphi 0, %s69
    %s95 = sphi 0, %s97
    %s98 = sphi 0, %s95
    %s99 = sphi 0, %s98
    %s115 = sphi 0, %s99
  $region4: #{_neg_giou_call.1} parent=0 // loop_header_branch
    %11 = sbr.rel (%p9) target = $region8
  $region5: #{_neg_giou_call.1} parent=0 // loop_body
    %s13 = ssub.s32 %s8, 1
    %s14 = ssub.s32 %s8, 2
    %s24 = sadd.s32 1, %s17
    %p25 = scmp.ge.s32.totalorder %s24, 1
    %s26 = scalar_select %p25, 0, %s24
    %s27 = sadd.s32 1, %s16
    %s28 = scalar_select %p25, %s27, %s16
    %p29 = scmp.ge.s32.totalorder %s28, 1
    %s30 = scalar_select %p29, 0, %s28
    %s31 = sadd.s32 1, %s15
    %s32 = scalar_select %p29, %s31, %s15
    %p33 = scmp.ge.s32.totalorder %s32, 2
    %s34 = scalar_select %p33, 0, %s32
    %s35 = ssub.s32 %s15, %s34
    %p36 = scmp.eq.s32.totalorder %s35, 0
    %s38 = sadd.s32 %s37, 1
    %s39 = scalar_select %p36, %s37, %s38
    %p42 = pneg %p36
    %p43 = scmp.eq.s32.totalorder %s8, 1
    %p44 = por %p42, %p43
    %p45 = scmp.ne.s32.totalorder %s37, %s40
    %p46 = scmp.eq.s32.totalorder %s8, 0
    %p47 = por %p45, %p46
    %p48 = scmp.ne.s32.totalorder %s37, %s40
    %p49 = scmp.eq.s32.totalorder %s13, 1
    %p50 = por %p48, %p49
    %p51 = scmp.ne.s32.totalorder %s40, %s41
    %p52 = scmp.eq.s32.totalorder %s13, 0
    %p53 = por %p51, %p52
    %p54 = scmp.ne.s32.totalorder %s40, %s41
    %p55 = scmp.eq.s32.totalorder %s14, 1
    %p56 = por %p54, %p55
    %p58 = scmp.ne.s32.totalorder %s41, %s57
    %p59 = scmp.eq.s32.totalorder %s14, 0
    %p60 = por %p58, %p59
    %s61 = ssub.s32 %s15, %s34
    %s62 = ssub.s32 %s17, %s26
    %s63 = sor.u32 %s61, %s62
    %p64 = scmp.eq.s32.totalorder %s63, 0
    %s66 = sadd.s32 %s65, 1
    %s67 = scalar_select %p64, %s65, %s66
    %p70 = pneg %p64
    %p71 = scmp.eq.s32.totalorder %s8, 1
    %p72 = por %p70, %p71
    %p73 = scmp.ne.s32.totalorder %s65, %s68
    %p74 = scmp.eq.s32.totalorder %s8, 0
    %p75 = por %p73, %p74
    %p76 = scmp.ne.s32.totalorder %s65, %s68
    %p77 = scmp.eq.s32.totalorder %s13, 1
    %p78 = por %p76, %p77
    %p79 = scmp.ne.s32.totalorder %s68, %s69
    %p80 = scmp.eq.s32.totalorder %s13, 0
    %p81 = por %p79, %p80
    %p82 = scmp.ne.s32.totalorder %s68, %s69
    %p83 = scmp.eq.s32.totalorder %s14, 1
    %p84 = por %p82, %p83
    %p86 = scmp.ne.s32.totalorder %s69, %s85
    %p87 = scmp.eq.s32.totalorder %s14, 0
    %p88 = por %p86, %p87
    %s89 = ssub.s32 %s15, %s34
    %s90 = ssub.s32 %s16, %s30
    %s91 = sor.u32 %s89, %s90
    %s92 = ssub.s32 %s17, %s26
    %s93 = sor.u32 %s91, %s92
    %p94 = scmp.eq.s32.totalorder %s93, 0
    %s96 = sadd.s32 %s95, 1
    %s97 = scalar_select %p94, %s95, %s96
    %p100 = pneg %p94
    %p101 = scmp.eq.s32.totalorder %s8, 1
    %p102 = por %p100, %p101
    %p103 = scmp.ne.s32.totalorder %s95, %s98
    %p104 = scmp.eq.s32.totalorder %s8, 0
    %p105 = por %p103, %p104
    %p106 = scmp.ne.s32.totalorder %s95, %s98
    %p107 = scmp.eq.s32.totalorder %s13, 1
    %p108 = por %p106, %p107
    %p109 = scmp.ne.s32.totalorder %s98, %s99
    %p110 = scmp.eq.s32.totalorder %s13, 0
    %p111 = por %p109, %p110
    %p112 = scmp.ne.s32.totalorder %s98, %s99
    %p113 = scmp.eq.s32.totalorder %s14, 1
    %p114 = por %p112, %p113
    %p116 = scmp.ne.s32.totalorder %s99, %s115
    %p117 = scmp.eq.s32.totalorder %s14, 0
    %p118 = por %p116, %p117
    %p119 = scmp.le.s32.totalorder 1, %s8
    %p120 = scmp.lt.s32.totalorder %s8, 3
    %p121 = pnand %p119, %p120
    %p122 = pneg %p121
    // Predicated region
    $region9: #{_neg_giou_call.1} parent=5 // pred_check
      _
    $region10: #{_neg_giou_call.1} parent=5 // pred_check_branch
      %124 = sbr.rel (%p121) target = $region12
    $region11: #{_neg_giou_call.1} parent=5 // pred_region
      %s125 = ssub.s32 %s8, 1
    $region12: #{_neg_giou_call.1} parent=5 // pred_fallthru
      _
    %p126 = scmp.lt.s32.totalorder %s8, 2
    // Predicated region
    $region13: #{_neg_giou_call.1} parent=5 // pred_check
      %p127 = pneg %p126
    $region14: #{_neg_giou_call.1} parent=5 // pred_check_branch
      %129 = sbr.rel (%p127) target = $region16
    $region15: #{_neg_giou_call.1} parent=5 // pred_region
      // Predicated region
      $region17: #{_neg_giou_call.1} parent=15 // pred_check
        %p130 = pneg %p47
      $region18: #{_neg_giou_call.1} parent=15 // pred_check_branch
        %132 = sbr.rel (%p130) target = $region20
      $region19: #{_neg_giou_call.1} parent=15 // pred_region
        %p133 = scmp.lt.s32.totalorder %s15, 1
        %s134 = scalar_select %p133, %s15, 1
        %s135 = smul.addr %s134, 8
        %s136 = scalar_lea.vmem %s0, %s135
      $region20: #{_neg_giou_call.1} parent=15 // pred_fallthru
        _
      // Predicated region
      $region21: #{_neg_giou_call.1} parent=15 // pred_check
        %p137 = pneg %p75
      $region22: #{_neg_giou_call.1} parent=15 // pred_check_branch
        %139 = sbr.rel (%p137) target = $region24
      $region23: #{_neg_giou_call.1} parent=15 // pred_region
        %p140 = scmp.lt.s32.totalorder %s15, 1
        %s141 = scalar_select %p140, %s15, 1
        %p142 = scmp.lt.s32.totalorder %s17, 0
        %s143 = scalar_select %p142, %s17, 0
        %s144 = sadd.s32 %s143, %s141
        %s145 = smul.addr %s144, 4
        %s146 = scalar_lea.vmem %s1, %s145
      $region24: #{_neg_giou_call.1} parent=15 // pred_fallthru
        _
    $region16: #{_neg_giou_call.1} parent=5 // pred_fallthru
      _
    %p147 = scmp.le.s32.totalorder 1, %s8
    %p148 = scmp.lt.s32.totalorder %s8, 3
    %p149 = pnand %p147, %p148
    %p150 = pneg %p149
    // Predicated region
    $region25: #{_neg_giou_call.1} parent=5 // pred_check
      _
    $region26: #{_neg_giou_call.1} parent=5 // pred_check_branch
      %152 = sbr.rel (%p149) target = $region28
    $region27: #{_neg_giou_call.1} parent=5 // pred_region
      %s153 = ssub.s32 %s8, 1
      %p154 = scmp.lt.s32.totalorder %s18, 1
      %s155 = scalar_select %p154, %s18, 1
      %s156 = smul.addr %s155, 8
      %s157 = scalar_lea.vmem %s0, %s156
      %p158 = pneg %p53
      %p159 = pneg %p50
      %p160 = scmp.lt.s32.totalorder %s18, 1
      %s161 = scalar_select %p160, %s18, 1
      %p162 = scmp.lt.s32.totalorder %s20, 0
      %s163 = scalar_select %p162, %s20, 0
      %s164 = sadd.s32 %s163, %s161
      %s165 = smul.addr %s164, 4
      %s166 = scalar_lea.vmem %s1, %s165
      %p167 = pneg %p81
      %p168 = pneg %p78
      %p169 = pneg %p111
      %p170 = pneg %p108
      %p171 = scmp.lt.s32.totalorder %s18, 1
      %s172 = scalar_select %p171, %s18, 1
      %p173 = scmp.lt.s32.totalorder %s19, 0
      %s174 = scalar_select %p173, %s19, 0
      %p175 = scmp.lt.s32.totalorder %s20, 0
      %s176 = scalar_select %p175, %s20, 0
      %s177 = sadd.s32 %s176, %s174
      %s178 = sadd.s32 %s177, %s172
      %s179 = smul.addr %s178, 8
      %s180 = scalar_lea.vmem %s2, %s179
      %p181 = scmp.lt.s32.totalorder %s18, 1
      %s182 = scalar_select %p181, %s18, 1
      %s183 = smul.addr %s182, 8
      %s184 = scalar_lea.vmem %s0, %s183
      %p185 = scmp.lt.s32.totalorder %s18, 1
      %s186 = scalar_select %p185, %s18, 1
      %p187 = scmp.lt.s32.totalorder %s20, 0
      %s188 = scalar_select %p187, %s20, 0
      %s189 = sadd.s32 %s188, %s186
      %s190 = smul.addr %s189, 4
      %s191 = scalar_lea.vmem %s1, %s190
      %p192 = scmp.lt.s32.totalorder %s18, 1
      %s193 = scalar_select %p192, %s18, 1
      %p194 = scmp.lt.s32.totalorder %s19, 0
      %s195 = scalar_select %p194, %s19, 0
      %p196 = scmp.lt.s32.totalorder %s20, 0
      %s197 = scalar_select %p196, %s20, 0
      %s198 = sadd.s32 %s197, %s195
      %s199 = sadd.s32 %s198, %s193
      %s200 = smul.addr %s199, 8
      %s201 = scalar_lea.vmem %s2, %s200
      %v202 = vld [vmem:[%s184] sm:$0xff]
      %v203 = vld [vmem:[%s191] sm:$0xf]
      %205 = vrot.lane.b32.xlu0 %v202, 2
      %v206 = vpop.permute.xlu0 %205
      %v208 = vsub.f32 %v202, %v206
      %210 = vrot.lane.b32.xlu0 %v208, 127
      %v211 = vpop.permute.xlu0 %210
      %v213 = vmul.f32 %v208, %v211
      %v215 = vrot.slane %v203, 6
      %v217 = vsub.f32 %v203, %v215
      %v219 = vrot.slane %v217, 1
      %v221 = vmul.f32 %v217, %v219
      %222 = vset.pattern.permute.xlu0 2
      %223 = vperm.xlu0 %222, %v202
      %v224 = vpop.permute.xlu0 %223
      %v226 = vlaneseq
      %v227 = vshrl.u32 %v226, 7
      %v228 = vsub.s32 2, %v227
      %v229 = vrot.slane %v203, %v228
      %v230 = vmin.f32 %v224, %v229
      %231 = vset.pattern.permute.xlu0 0
      %232 = vperm.xlu0 %231, %v202
      %v233 = vpop.permute.xlu0 %232
      %v235 = vlaneseq
      %v236 = vshrl.u32 %v235, 7
      %v237 = vsub.s32 0, %v236
      %v238 = vrot.slane %v203, %v237
      %v239 = vmax.f32 %v233, %v238
      %v240 = vsub.f32 %v230, %v239
      %v241 = vmax.f32 %v240, 0.0
      %242 = vset.pattern.permute.xlu0 3
      %243 = vperm.xlu0 %242, %v202
      %v244 = vpop.permute.xlu0 %243
      %v246 = vlaneseq
      %v247 = vshrl.u32 %v246, 7
      %v248 = vsub.s32 3, %v247
      %v249 = vrot.slane %v203, %v248
      %v250 = vmin.f32 %v244, %v249
      %251 = vset.pattern.permute.xlu0 1
      %252 = vperm.xlu0 %251, %v202
      %v253 = vpop.permute.xlu0 %252
      %v255 = vlaneseq
      %v256 = vshrl.u32 %v255, 7
      %v257 = vsub.s32 1, %v256
      %v258 = vrot.slane %v203, %v257
      %v259 = vmax.f32 %v253, %v258
      %v260 = vsub.f32 %v250, %v259
      %v261 = vmax.f32 %v260, 0.0
      %v262 = vmul.f32 %v241, %v261
      %264 = vset.pattern.permute.xlu0 2
      %265 = vperm.xlu0 %264, %v213
      %v266 = vpop.permute.xlu0 %265
      %v268 = vlaneseq
      %v269 = vshrl.u32 %v268, 7
      %v270 = vsub.s32 2, %v269
      %v271 = vrot.slane %v221, %v270
      %v272 = vadd.f32 %v266, %v271
      %v273 = vsub.f32 %v272, %v262
      %v274 = vmax.f32 %v273, 1e-07
      %v275 = vmax.f32 %v224, %v229
      %v276 = vmin.f32 %v233, %v238
      %v277 = vsub.f32 %v275, %v276
      %v278 = vmax.f32 %v244, %v249
      %v279 = vmin.f32 %v253, %v258
      %v280 = vsub.f32 %v278, %v279
      %v281 = vmul.f32 %v277, %v280
      %v282 = vmax.f32 %v281, 1e-07
      %v283 = vrcp.pop %v274
      %v284 = vmul.f32 %v274, %v283
      %v285 = vsub.f32 2.0, %v284
      %v286 = vmul.f32 %v283, %v285
      %v287 = vrcp.pop %v282
      %v288 = vmul.f32 %v282, %v287
      %v289 = vsub.f32 2.0, %v288
      %v290 = vmul.f32 %v287, %v289
      %v291 = vmul.f32 %v262, %v286
      %v292 = vsub.f32 1.0, %v291
      %v293 = vmul.f32 %v274, %v290
      %v294 = vsub.f32 %v292, %v293
      %295 = vst [vmem:[%s201] sm:$0xff] %v294
      %p296 = scmp.lt.s32.totalorder %s18, 1
      %s297 = scalar_select %p296, %s18, 1
      %p298 = scmp.lt.s32.totalorder %s19, 0
      %s299 = scalar_select %p298, %s19, 0
      %p300 = scmp.lt.s32.totalorder %s20, 0
      %s301 = scalar_select %p300, %s20, 0
      %s302 = sadd.s32 %s301, %s299
      %s303 = sadd.s32 %s302, %s297
      %s304 = smul.addr %s303, 8
      %s305 = scalar_lea.vmem %s2, %s304
      // Predicated region
      $region29: #{_neg_giou_call.1} parent=27 // pred_check
        %p306 = pneg %p108
      $region30: #{_neg_giou_call.1} parent=27 // pred_check_branch
        %308 = sbr.rel (%p306) target = $region32
      $region31: #{_neg_giou_call.1} parent=27 // pred_region
        _
      $region32: #{_neg_giou_call.1} parent=27 // pred_fallthru
        _
    $region28: #{_neg_giou_call.1} parent=5 // pred_fallthru
      _
    %p309 = scmp.le.s32.totalorder 2, %s8
    // Predicated region
    $region33: #{_neg_giou_call.1} parent=5 // pred_check
      %p310 = pneg %p309
    $region34: #{_neg_giou_call.1} parent=5 // pred_check_branch
      %312 = sbr.rel (%p310) target = $region36
    $region35: #{_neg_giou_call.1} parent=5 // pred_region
      %s313 = ssub.s32 %s8, 2
      // Predicated region
      $region37: #{_neg_giou_call.1} parent=35 // pred_check
        %p314 = pneg %p114
      $region38: #{_neg_giou_call.1} parent=35 // pred_check_branch
        %316 = sbr.rel (%p314) target = $region40
      $region39: #{_neg_giou_call.1} parent=35 // pred_region
        %p317 = scmp.lt.s32.totalorder %s21, 1
        %s318 = scalar_select %p317, %s21, 1
        %p319 = scmp.lt.s32.totalorder %s22, 0
        %s320 = scalar_select %p319, %s22, 0
        %p321 = scmp.lt.s32.totalorder %s23, 0
        %s322 = scalar_select %p321, %s23, 0
        %s323 = sadd.s32 %s322, %s320
        %s324 = sadd.s32 %s323, %s318
        %s325 = smul.addr %s324, 8
        %s326 = scalar_lea.vmem %s2, %s325
      $region40: #{_neg_giou_call.1} parent=35 // pred_fallthru
        _
    $region36: #{_neg_giou_call.1} parent=5 // pred_fallthru
      _
  $region6: #{_neg_giou_call.1} parent=0 // loop_footer
    %s12 = sadd.s32 1, %s8
  $region7: #{_neg_giou_call.1} parent=0 // loop_footer_branch
    %7 = sbr.rel target = $region3
  $region8: #{_neg_giou_call.1} parent=0 // loop_exit
    _

</llo_original>
